<compile_context>
chip_gen: v7x
topology: tpu7x:2x2x1
jax: 0.10.0
libtpu: 0.0.40
codegen_flags: <defaults>
</compile_context>

<pallas_src>
import functools

import jax
import jax.numpy as jnp
from jax.experimental import pallas as pl
from jax.experimental.pallas import tpu as pltpu


_TARGET_MIN_STEPS = 8                     # keep both v7x TCs busy, amortize per-step overhead
_VMEM_BLOCK_BUDGET = 32 * 1024 * 1024     # sizing budget for one grid step (incl. temporaries)
_VMEM_LIMIT = 48 * 1024 * 1024            # explicit scoped-VMEM limit (fits v7x 64 MiB physical)
_F32_TEMPS = 6                            # f32-sized in-kernel temporaries per element (upcasts,
                                          # exp, iota/select) on top of the 2x2 input buffers


def _ce_kernel(logits_ref, tgt_ref, out_ref, *, pix_axis, pix_tile, pix_total,
               ragged, lane_out, exact_argmax):
    """One grid step: CE partial sum for a (bn, C, br, bl) pixel block.

    Channel axis is axis 1 (a leading dim), so all channel reductions are
    elementwise passes over C pixel-dense slabs (no cross-lane XLU work).
    """
    x = logits_ref[...].astype(jnp.float32)          # (bn, C, br, bl)
    t = tgt_ref[...]                                 # (bn, C, br, bl), any dtype
    C = x.shape[1]

    # Numerically stable log-sum-exp over channels.
    m = jnp.max(x, axis=1, keepdims=True)            # (bn, 1, br, bl)
    lse = m + jnp.log(jnp.sum(jnp.exp(x - m), axis=1, keepdims=True))

    if exact_argmax:
        # torch.argmax semantics: first max wins on ties / soft targets.
        ch = jax.lax.broadcasted_iota(jnp.int32, x.shape, 1)
        tmax = jnp.max(t, axis=1, keepdims=True)
        tidx = jnp.min(jnp.where(t == tmax, ch, C), axis=1, keepdims=True)
        picked = jnp.sum(jnp.where(ch == tidx, x, 0.0), axis=1, keepdims=True)
    else:
        # One-hot dot: exact for strictly one-hot targets, cheaper on VPU.
        picked = jnp.sum(t.astype(jnp.float32) * x, axis=1, keepdims=True)

    loss = lse - picked                               # (bn, 1, br, bl)

    def finish(apply_mask):
        l = loss
        if apply_mask:
            idx = (jax.lax.broadcasted_iota(jnp.int32, l.shape, pix_axis)
                   + pl.program_id(1) * pix_tile)
            l = jnp.where(idx < pix_total, l, 0.0)    # zero the ragged tail
        if lane_out:
            # lane-dense (1,1,1,128) partial: only sublane/leading-dim reduces.
            out_ref[...] = jnp.sum(l, axis=(0, 1, 2), keepdims=True)
        else:
            # fallback layout: scalar partial stored in lane 0.
            s = jnp.sum(l)
            lane = jax.lax.broadcasted_iota(jnp.int32, out_ref.shape, 3)
            out_ref[...] = jnp.where(lane == 0, s, jnp.float32(0))

    if ragged:
        last = pl.num_programs(1) - 1

        @pl.when(pl.program_id(1) == last)
        def _():
            finish(True)

        @pl.when(pl.program_id(1) != last)
        def _():
            finish(False)
    else:
        finish(False)


def _largest_divisor_leq(n, cap):
    cap = max(1, min(n, cap))
    for d in range(cap, 0, -1):
        if n % d == 0:
            return d
    return 1


def ce_loss_pallas(inputs_nchw, targets_nchw, assume_onehot_targets=False):
    """Cross-entropy loss: NCHW logits vs. NCHW one-hot targets. Returns scalar."""
    N, C, H, W = inputs_nchw.shape
    assert targets_nchw.shape == (N, C, H, W)
    HW = H * W
    P = N * HW

    in_item = jnp.dtype(inputs_nchw.dtype).itemsize
    tgt_item = jnp.dtype(targets_nchw.dtype).itemsize
    # Sublane multiple required for a non-full second-to-last block dim.
    sub_mult = max(8, 32 // min(in_item, tgt_item))

    # VMEM per block element: 2 inputs x 2 pipeline buffers + f32 temporaries.
    per_elem_bytes = 2 * (in_item + tgt_item) + _F32_TEMPS * 4
    max_elems = max(_VMEM_BLOCK_BUDGET // per_elem_bytes, C * 128)

    if HW % 128 == 0:
        # ---- main path: (N, C, R, 128), pixel-dense last two dims ----------
        R = HW // 128
        logits = inputs_nchw.reshape(N, C, R, 128)
        tgt = targets_nchw.reshape(N, C, R, 128)

        vmem_rows = max(1, max_elems // (C * 128))            # 128-pixel rows per block
        total_rows = N * R
        step_rows = max(1, pl.cdiv(total_rows, _TARGET_MIN_STEPS))
        rows_blk = max(1, min(vmem_rows, step_rows))

        if rows_blk >= R or R <= sub_mult:
            br = R                                            # full pixel extent per image
            bn = _largest_divisor_leq(N, max(1, rows_blk // R))  # batch images per block
        else:
            bn = 1
            br = max(sub_mult, (rows_blk // sub_mult) * sub_mult)
            if br >= R:
                br = R

        grid = (N // bn, pl.cdiv(R, br))
        ragged = (R % br) != 0
        block = (bn, C, br, 128)
        imap = lambda i, j: (i, 0, j, 0)
        pix_axis, pix_tile, pix_total, lane_out = 2, br, R, True
    else:
        # ---- fallback: (N, C, 1, HW), tile along lanes ----------------------
        L = HW
        logits = inputs_nchw.reshape(N, C, 1, L)
        tgt = targets_nchw.reshape(N, C, 1, L)

        vmem_pix = max(128, ((max_elems // C) // 128) * 128)
        total_pix = N * L
        step_pix = max(1, pl.cdiv(total_pix, _TARGET_MIN_STEPS))
        pix_blk = max(1, min(vmem_pix, step_pix))

        if pix_blk >= L:
            bl = L
            bn = _largest_divisor_leq(N, max(1, pix_blk // L))
        else:
            bn = 1
            bl = max(128, (pix_blk // 128) * 128)
            if bl >= L:
                bl = L

        grid = (N // bn, pl.cdiv(L, bl))
        ragged = (L % bl) != 0
        block = (bn, C, 1, bl)
        imap = lambda i, j: (i, 0, 0, j)
        pix_axis, pix_tile, pix_total, lane_out = 3, bl, L, False

    gn, gp = grid
    kernel = functools.partial(
        _ce_kernel, pix_axis=pix_axis, pix_tile=pix_tile, pix_total=pix_total,
        ragged=ragged, lane_out=lane_out, exact_argmax=not assume_onehot_targets)

    elems = N * C * HW
    cost = pl.CostEstimate(
        flops=10 * elems,
        transcendentals=elems + P,
        bytes_accessed=elems * (in_item + tgt_item) + gn * gp * 128 * 4)

    partials = pl.pallas_call(
        kernel,
        out_shape=jax.ShapeDtypeStruct((gn, gp, 1, 128), jnp.float32),
        grid=grid,
        in_specs=[
            pl.BlockSpec(block, imap),
            pl.BlockSpec(block, imap),
        ],
        out_specs=pl.BlockSpec((1, 1, 1, 128), lambda i, j: (i, j, 0, 0)),
        compiler_params=pltpu.CompilerParams(
            dimension_semantics=("parallel", "parallel"),
            vmem_limit_bytes=_VMEM_LIMIT),
        cost_estimate=cost,
    )(logits, tgt)

    # Final mean over all pixels (tiny reduce done by XLA outside the kernel).
    return jnp.sum(partials) / jnp.float32(P)


def ce_loss_ref(inputs_nchw, targets_nchw):
    """Pure-JAX reference matching nn.CrossEntropyLoss(targets.argmax(dim=1))."""
    N, C, H, W = inputs_nchw.shape
    logits = jnp.transpose(inputs_nchw, (0, 2, 3, 1)).reshape(-1, C).astype(jnp.float32)
    tidx = jnp.argmax(
        jnp.transpose(targets_nchw, (0, 2, 3, 1)).reshape(-1, C), axis=-1)
    logz = jax.scipy.special.logsumexp(logits, axis=-1)
    picked = jnp.take_along_axis(logits, tidx[:, None], axis=-1)[:, 0]
    return jnp.mean(logz - picked)


if __name__ == "__main__":
    key = jax.random.PRNGKey(0)
    k1, k2, k3, k4 = jax.random.split(key, 4)

    # Main path: batch=2, channels=4, spatial 16x16 (HW divisible by 128).
    N, C, H, W = 2, 4, 16, 16
    inputs = jax.random.normal(k1, (N, C, H, W), dtype=jnp.float32)
    cls = jax.random.randint(k2, (N, H, W), 0, C)
    targets = jnp.transpose(jax.nn.one_hot(cls, C, dtype=jnp.float32), (0, 3, 1, 2))

    loss = ce_loss_pallas(inputs, targets)                    # exact argmax semantics
    jax.block_until_ready(loss)
    ref = ce_loss_ref(inputs, targets)
    assert jnp.allclose(loss, ref, atol=1e-5, rtol=1e-5), (loss, ref)

    loss_fast = ce_loss_pallas(inputs, targets, assume_onehot_targets=True)
    jax.block_until_ready(loss_fast)
    assert jnp.allclose(loss_fast, ref, atol=1e-5, rtol=1e-5), (loss_fast, ref)

    # Fallback path: spatial 10x10 (HW not divisible by 128).
    N2, C2, H2, W2 = 2, 3, 10, 10
    inputs2 = jax.random.normal(k3, (N2, C2, H2, W2), dtype=jnp.float32)
    cls2 = jax.random.randint(k4, (N2, H2, W2), 0, C2)
    targets2 = jnp.transpose(jax.nn.one_hot(cls2, C2, dtype=jnp.float32), (0, 3, 1, 2))

    loss2 = ce_loss_pallas(inputs2, targets2)
    jax.block_until_ready(loss2)
    ref2 = ce_loss_ref(inputs2, targets2)
    assert jnp.allclose(loss2, ref2, atol=1e-5, rtol=1e-5), (loss2, ref2)

    print("KERNEL_OK")
</pallas_src>

<mosaic_0001>
module attributes {stable_mosaic.version = 11 : i64} {
  func.func @_ce_kernel(%arg0: i32, %arg1: i32, %arg2: memref<1x4x2x128xf32, #tpu.memory_space<vmem>>, %arg3: memref<1x4x2x128xf32, #tpu.memory_space<vmem>>, %arg4: memref<1x1x1x128xf32, #tpu.memory_space<vmem>>) attributes {dimension_semantics = [#tpu.dimension_semantics<parallel>, #tpu.dimension_semantics<parallel>], iteration_bounds = array<i64: 2, 1>, scalar_prefetch = 0 : i64, scratch_operands = 0 : i64, tpu.core_type = #tpu.core_type<tc>, window_params = [{transform_indices = @transform_0, window_bounds = array<i64: 1, 4, 2, 128>}, {transform_indices = @transform_1, window_bounds = array<i64: 1, 4, 2, 128>}, {transform_indices = @transform_2, window_bounds = array<i64: 1, 1, 1, 128>}]} {
    %c0 = arith.constant 0 : index
    %c0_0 = arith.constant 0 : index
    %c0_1 = arith.constant 0 : index
    %c0_2 = arith.constant 0 : index
    %0 = vector.load %arg2[%c0, %c0_0, %c0_1, %c0_2] : memref<1x4x2x128xf32, #tpu.memory_space<vmem>>, vector<1x4x2x128xf32>
    %c0_3 = arith.constant 0 : index
    %c0_4 = arith.constant 0 : index
    %c0_5 = arith.constant 0 : index
    %c0_6 = arith.constant 0 : index
    %1 = vector.load %arg3[%c0_3, %c0_4, %c0_5, %c0_6] : memref<1x4x2x128xf32, #tpu.memory_space<vmem>>, vector<1x4x2x128xf32>
    %cst = arith.constant dense<0xFF800000> : vector<1x2x128xf32>
    %2 = vector.multi_reduction <maximumf>, %0, %cst [1] : vector<1x4x2x128xf32> to vector<1x2x128xf32>
    %3 = vector.shape_cast %2 : vector<1x2x128xf32> to vector<1x1x2x128xf32>
    %4 = vector.broadcast %3 : vector<1x1x2x128xf32> to vector<1x4x2x128xf32>
    %5 = arith.subf %0, %4 : vector<1x4x2x128xf32>
    %6 = math.exp %5 : vector<1x4x2x128xf32>
    %cst_7 = arith.constant dense<0.000000e+00> : vector<1x2x128xf32>
    %7 = vector.multi_reduction <add>, %6, %cst_7 [1] : vector<1x4x2x128xf32> to vector<1x2x128xf32>
    %8 = vector.shape_cast %7 : vector<1x2x128xf32> to vector<1x1x2x128xf32>
    %9 = math.log %8 : vector<1x1x2x128xf32>
    %10 = arith.addf %3, %9 : vector<1x1x2x128xf32>
    %11 = tpu.iota {dimensions = array<i32: 1>} : vector<1x4x2x128xi32>
    %cst_8 = arith.constant dense<0xFF800000> : vector<1x2x128xf32>
    %12 = vector.multi_reduction <maximumf>, %1, %cst_8 [1] : vector<1x4x2x128xf32> to vector<1x2x128xf32>
    %13 = vector.shape_cast %12 : vector<1x2x128xf32> to vector<1x1x2x128xf32>
    %14 = vector.broadcast %13 : vector<1x1x2x128xf32> to vector<1x4x2x128xf32>
    %15 = arith.cmpf oeq, %1, %14 : vector<1x4x2x128xf32>
    %c4_i32 = arith.constant 4 : i32
    %16 = vector.broadcast %c4_i32 : i32 to vector<1x4x2x128xi32>
    %17 = arith.select %15, %11, %16 : vector<1x4x2x128xi1>, vector<1x4x2x128xi32>
    %cst_9 = arith.constant dense<2147483647> : vector<1x2x128xi32>
    %18 = vector.multi_reduction <minsi>, %17, %cst_9 [1] : vector<1x4x2x128xi32> to vector<1x2x128xi32>
    %19 = vector.shape_cast %18 : vector<1x2x128xi32> to vector<1x1x2x128xi32>
    %20 = vector.broadcast %19 : vector<1x1x2x128xi32> to vector<1x4x2x128xi32>
    %21 = arith.cmpi eq, %11, %20 : vector<1x4x2x128xi32>
    %cst_10 = arith.constant 0.000000e+00 : f32
    %22 = vector.broadcast %cst_10 : f32 to vector<1x4x2x128xf32>
    %23 = arith.select %21, %0, %22 : vector<1x4x2x128xi1>, vector<1x4x2x128xf32>
    %cst_11 = arith.constant dense<0.000000e+00> : vector<1x2x128xf32>
    %24 = vector.multi_reduction <add>, %23, %cst_11 [1] : vector<1x4x2x128xf32> to vector<1x2x128xf32>
    %25 = vector.shape_cast %24 : vector<1x2x128xf32> to vector<1x1x2x128xf32>
    %26 = arith.subf %10, %25 : vector<1x1x2x128xf32>
    %cst_12 = arith.constant dense<0.000000e+00> : vector<128xf32>
    %27 = vector.multi_reduction <add>, %26, %cst_12 [0, 1, 2] : vector<1x1x2x128xf32> to vector<128xf32>
    %28 = vector.shape_cast %27 : vector<128xf32> to vector<1x1x1x128xf32>
    %c0_13 = arith.constant 0 : index
    %c0_14 = arith.constant 0 : index
    %c0_15 = arith.constant 0 : index
    %c0_16 = arith.constant 0 : index
    %29 = vector.load %arg4[%c0_13, %c0_14, %c0_15, %c0_16] : memref<1x1x1x128xf32, #tpu.memory_space<vmem>>, vector<1x1x1x128xf32>
    tpu.vector_store %arg4[%c0_13, %c0_14, %c0_15, %c0_16], %28 {strides = array<i32>} : memref<1x1x1x128xf32, #tpu.memory_space<vmem>>, vector<1x1x1x128xf32>,
    return
  }
  func.func @transform_0(%arg0: i32, %arg1: i32) -> (i32, i32, i32, i32) {
    %c0_i32 = arith.constant 0 : i32
    %c0_i32_0 = arith.constant 0 : i32
    %c0_i32_1 = arith.constant 0 : i32
    return %arg0, %c0_i32, %arg1, %c0_i32_0 : i32, i32, i32, i32
  }
  func.func @transform_1(%arg0: i32, %arg1: i32) -> (i32, i32, i32, i32) {
    %c0_i32 = arith.constant 0 : i32
    %c0_i32_0 = arith.constant 0 : i32
    %c0_i32_1 = arith.constant 0 : i32
    return %arg0, %c0_i32, %arg1, %c0_i32_0 : i32, i32, i32, i32
  }
  func.func @transform_2(%arg0: i32, %arg1: i32) -> (i32, i32, i32, i32) {
    %c0_i32 = arith.constant 0 : i32
    %c0_i32_0 = arith.constant 0 : i32
    %c0_i32_1 = arith.constant 0 : i32
    return %arg0, %arg1, %c0_i32, %c0_i32_0 : i32, i32, i32, i32
  }
}

</mosaic_0001>

<llo_original>
// kernel: tpu_custom_call.1
$region0: #{tpu_custom_call.1}
  #allocation0 [shape = 'u32[]', space=smem, size = 0x4, offset = 0x4, fixed_abs, tag = 'smem constant byte address 0x4 - core index']
  #allocation1 [shape = 'u32[144,128]{1,0:T(1,128)}', space=vmem, size = 0x12000, scoped, tag = 'internal scratch']
  %s0 = inlined_call_operand.hbm [shape: f32[2,4,2,128], index: 0, kind: input, shape index: {}]
  %s1 = inlined_call_operand.hbm [shape: f32[2,4,2,128], index: 1, kind: input, shape index: {}]
  %s2 = inlined_call_operand.hbm [shape: f32[2,1,1,128], index: 2, kind: output, shape index: {}]
  %s3 = sld [smem:[#allocation0]]
  $region49: #{tpu_custom_call.1} parent=0
    _
  %s5 = ssub.s32 1, %s3
  %s6 = scalar_select 0, %s5, %s3
  $region1: #{tpu_custom_call.1} parent=0
    #allocation2 [shape = 'u8[8192]{0}', space=vmem, size = 0x2000, scoped, tag = 'input window, operand 0']
    #allocation3 [shape = 's32[2]{0}', space=sflag, size = 0x8, scoped, tag = 'scoped memory for tpu_custom_call.1']
    #allocation4 [shape = 's32[2]{0}', space=sflag, size = 0x8, scoped, tag = 'scoped memory for tpu_custom_call.1']
    #allocation5 [shape = 'u8[8192]{0}', space=vmem, size = 0x2000, scoped, tag = 'input window, operand 1']
    #allocation6 [shape = 's32[2]{0}', space=sflag, size = 0x8, scoped, tag = 'scoped memory for tpu_custom_call.1']
    #allocation7 [shape = 'u8[1024]{0}', space=vmem, size = 0x400, scoped, tag = 'output window, operand 0']
    %7 = vsyncpa [#allocation3], 0
    %s8 = scalar_lea.sflag [#allocation3], 1
    %9 = vsyncpa %s8, 0
    %10 = vsyncpa [#allocation6], 0
    %s11 = scalar_lea.sflag [#allocation6], 1
    %12 = vsyncpa %s11, 0
    %13 = vsyncpa [#allocation4], 0
    %s14 = scalar_lea.sflag [#allocation4], 1
    %15 = vsyncpa %s14, 0
    loop: start=0, step=1, limit=4
    $region2: #{tpu_custom_call.1} parent=1 // loop_pre_header
      _
    $region3: #{tpu_custom_call.1} parent=1 // loop_header
      %s17 = sphi 0, %s21
      %p18 = scmp.ge.s32.totalorder %s17, 4
      %s24 = sphi 0, %s36
      %s25 = sphi 0, %s32
      %s26 = sphi 0, %s24
      %s27 = sphi 0, %s25
      %s28 = sphi 0, %s26
      %s29 = sphi 0, %s27
      %s41 = sphi 0, %s43
      %s44 = sphi 0, %s41
      %s45 = sphi 0, %s44
      %s61 = sphi 0, %s45
      %s69 = sphi 0, %s71
      %s72 = sphi 0, %s69
      %s73 = sphi 0, %s72
      %s89 = sphi 0, %s73
      %s97 = sphi 0, %s99
      %s100 = sphi 0, %s97
      %s101 = sphi 0, %s100
      %s117 = sphi 0, %s101
    $region4: #{tpu_custom_call.1} parent=1 // loop_header_branch
      %20 = sbr.rel (%p18) target = $region8
    $region5: #{tpu_custom_call.1} parent=1 // loop_body
      %s22 = ssub.s32 %s17, 1
      %s23 = ssub.s32 %s17, 2
      %s30 = sadd.s32 1, %s25
      %p31 = scmp.ge.s32.totalorder %s30, 1
      %s32 = scalar_select %p31, 0, %s30
      %s33 = sadd.s32 1, %s24
      %s34 = scalar_select %p31, %s33, %s24
      %p35 = scmp.ge.s32.totalorder %s34, 2
      %s36 = scalar_select %p35, 0, %s34
      %s37 = ssub.s32 %s24, %s36
      %s38 = ssub.s32 %s25, %s32
      %s39 = sor.u32 %s37, %s38
      %p40 = scmp.eq.s32.totalorder %s39, 0
      %s42 = sadd.s32 %s41, 1
      %s43 = scalar_select %p40, %s41, %s42
      %p46 = pneg %p40
      %p47 = scmp.eq.s32.totalorder %s17, 1
      %p48 = por %p46, %p47
      %p49 = scmp.ne.s32.totalorder %s41, %s44
      %p50 = scmp.eq.s32.totalorder %s17, 0
      %p51 = por %p49, %p50
      %p52 = scmp.ne.s32.totalorder %s41, %s44
      %p53 = scmp.eq.s32.totalorder %s22, 1
      %p54 = por %p52, %p53
      %p55 = scmp.ne.s32.totalorder %s44, %s45
      %p56 = scmp.eq.s32.totalorder %s22, 0
      %p57 = por %p55, %p56
      %p58 = scmp.ne.s32.totalorder %s44, %s45
      %p59 = scmp.eq.s32.totalorder %s23, 1
      %p60 = por %p58, %p59
      %p62 = scmp.ne.s32.totalorder %s45, %s61
      %p63 = scmp.eq.s32.totalorder %s23, 0
      %p64 = por %p62, %p63
      %s65 = ssub.s32 %s24, %s36
      %s66 = ssub.s32 %s25, %s32
      %s67 = sor.u32 %s65, %s66
      %p68 = scmp.eq.s32.totalorder %s67, 0
      %s70 = sadd.s32 %s69, 1
      %s71 = scalar_select %p68, %s69, %s70
      %p74 = pneg %p68
      %p75 = scmp.eq.s32.totalorder %s17, 1
      %p76 = por %p74, %p75
      %p77 = scmp.ne.s32.totalorder %s69, %s72
      %p78 = scmp.eq.s32.totalorder %s17, 0
      %p79 = por %p77, %p78
      %p80 = scmp.ne.s32.totalorder %s69, %s72
      %p81 = scmp.eq.s32.totalorder %s22, 1
      %p82 = por %p80, %p81
      %p83 = scmp.ne.s32.totalorder %s72, %s73
      %p84 = scmp.eq.s32.totalorder %s22, 0
      %p85 = por %p83, %p84
      %p86 = scmp.ne.s32.totalorder %s72, %s73
      %p87 = scmp.eq.s32.totalorder %s23, 1
      %p88 = por %p86, %p87
      %p90 = scmp.ne.s32.totalorder %s73, %s89
      %p91 = scmp.eq.s32.totalorder %s23, 0
      %p92 = por %p90, %p91
      %s93 = ssub.s32 %s24, %s36
      %s94 = ssub.s32 %s25, %s32
      %s95 = sor.u32 %s93, %s94
      %p96 = scmp.eq.s32.totalorder %s95, 0
      %s98 = sadd.s32 %s97, 1
      %s99 = scalar_select %p96, %s97, %s98
      %p102 = pneg %p96
      %p103 = scmp.eq.s32.totalorder %s17, 1
      %p104 = por %p102, %p103
      %p105 = scmp.ne.s32.totalorder %s97, %s100
      %p106 = scmp.eq.s32.totalorder %s17, 0
      %p107 = por %p105, %p106
      %p108 = scmp.ne.s32.totalorder %s97, %s100
      %p109 = scmp.eq.s32.totalorder %s22, 1
      %p110 = por %p108, %p109
      %p111 = scmp.ne.s32.totalorder %s100, %s101
      %p112 = scmp.eq.s32.totalorder %s22, 0
      %p113 = por %p111, %p112
      %p114 = scmp.ne.s32.totalorder %s100, %s101
      %p115 = scmp.eq.s32.totalorder %s23, 1
      %p116 = por %p114, %p115
      %p118 = scmp.ne.s32.totalorder %s101, %s117
      %p119 = scmp.eq.s32.totalorder %s23, 0
      %p120 = por %p118, %p119
      %p121 = scmp.le.s32.totalorder 1, %s17
      %p122 = scmp.lt.s32.totalorder %s17, 3
      %p123 = pnand %p121, %p122
      %p124 = pneg %p123
      // Predicated region
      $region9: #{tpu_custom_call.1} parent=5 // pred_check
        _
      $region10: #{tpu_custom_call.1} parent=5 // pred_check_branch
        %126 = sbr.rel (%p123) target = $region12
      $region11: #{tpu_custom_call.1} parent=5 // pred_region
        %s127 = ssub.s32 %s17, 1
      $region12: #{tpu_custom_call.1} parent=5 // pred_fallthru
        _
      %p128 = scmp.lt.s32.totalorder %s17, 2
      // Predicated region
      $region13: #{tpu_custom_call.1} parent=5 // pred_check
        %p129 = pneg %p128
      $region14: #{tpu_custom_call.1} parent=5 // pred_check_branch
        %131 = sbr.rel (%p129) target = $region16
      $region15: #{tpu_custom_call.1} parent=5 // pred_region
        // Predicated region
        $region17: #{tpu_custom_call.1} parent=15 // pred_check
          %p132 = pneg %p51
        $region18: #{tpu_custom_call.1} parent=15 // pred_check_branch
          %134 = sbr.rel (%p132) target = $region20
        $region19: #{tpu_custom_call.1} parent=15 // pred_region
          %s135 = sand.u32 %s41, 1
          %s136 = scalar_lea.sflag [#allocation3], %s135
          %s137 = sand.u32 %s41, 1
          %s138 = smul.addr %s137, 8
          %s139 = scalar_lea.vmem [#allocation2], %s138
          %s141 = ssub.s32 128, 128
          %142 = vsyncadd %s136, %s141
          %s143 = smul.addr %s24, 4
          %s144 = sadd.s32 %s25, %s143
          %s145 = smul.addr %s144, 32
          %s146 = scalar_lea.hbm %s0, %s145
          %s147 = sshll.u32 %s139, 4
          %s148 = int_to_ptr.vmem [resolvable:$true] %s147
          %153 = dma.hbm_to_vmem [thread:$0]  %s146, 128, %s148, %s136, 32, 32, 2
        $region20: #{tpu_custom_call.1} parent=15 // pred_fallthru
          _
        // Predicated region
        $region21: #{tpu_custom_call.1} parent=15 // pred_check
          %p154 = pneg %p79
        $region22: #{tpu_custom_call.1} parent=15 // pred_check_branch
          %156 = sbr.rel (%p154) target = $region24
        $region23: #{tpu_custom_call.1} parent=15 // pred_region
          %s157 = sand.u32 %s69, 1
          %s158 = scalar_lea.sflag [#allocation6], %s157
          %s159 = sand.u32 %s69, 1
          %s160 = smul.addr %s159, 8
          %s161 = scalar_lea.vmem [#allocation5], %s160
          %s163 = ssub.s32 128, 128
          %164 = vsyncadd %s158, %s163
          %s165 = smul.addr %s24, 4
          %s166 = sadd.s32 %s25, %s165
          %s167 = smul.addr %s166, 32
          %s168 = scalar_lea.hbm %s1, %s167
          %s169 = sshll.u32 %s161, 4
          %s170 = int_to_ptr.vmem [resolvable:$true] %s169
          %175 = dma.hbm_to_vmem [thread:$0]  %s168, 128, %s170, %s158, 32, 32, 2
        $region24: #{tpu_custom_call.1} parent=15 // pred_fallthru
          _
      $region16: #{tpu_custom_call.1} parent=5 // pred_fallthru
        _
      %p176 = scmp.le.s32.totalorder 1, %s17
      %p177 = scmp.lt.s32.totalorder %s17, 3
      %p178 = pnand %p176, %p177
      %p179 = pneg %p178
      // Predicated region
      $region25: #{tpu_custom_call.1} parent=5 // pred_check
        _
      $region26: #{tpu_custom_call.1} parent=5 // pred_check_branch
        %181 = sbr.rel (%p178) target = $region28
      $region27: #{tpu_custom_call.1} parent=5 // pred_region
        %s182 = ssub.s32 %s17, 1
        %s183 = sand.u32 %s44, 1
        %s184 = scalar_lea.sflag [#allocation3], %s183
        %s185 = sand.u32 %s44, 1
        %s186 = smul.addr %s185, 8
        %s187 = scalar_lea.vmem [#allocation2], %s186
        // Predicated region
        $region29: #{tpu_custom_call.1} parent=27 // pred_check
          %p188 = pneg %p57
        $region30: #{tpu_custom_call.1} parent=27 // pred_check_branch
          %190 = sbr.rel (%p188) target = $region32
        $region31: #{tpu_custom_call.1} parent=27 // pred_region
          %191 = dma.done %s184, 128
        $region32: #{tpu_custom_call.1} parent=27 // pred_fallthru
          _
        %s192 = sand.u32 %s72, 1
        %s193 = scalar_lea.sflag [#allocation6], %s192
        %s194 = sand.u32 %s72, 1
        %s195 = smul.addr %s194, 8
        %s196 = scalar_lea.vmem [#allocation5], %s195
        // Predicated region
        $region33: #{tpu_custom_call.1} parent=27 // pred_check
          %p197 = pneg %p85
        $region34: #{tpu_custom_call.1} parent=27 // pred_check_branch
          %199 = sbr.rel (%p197) target = $region36
        $region35: #{tpu_custom_call.1} parent=27 // pred_region
          %200 = dma.done %s193, 128
        $region36: #{tpu_custom_call.1} parent=27 // pred_fallthru
          _
        %s201 = sand.u32 %s44, 1
        %s202 = scalar_lea.sflag [#allocation3], %s201
        %s203 = sand.u32 %s44, 1
        %s204 = smul.addr %s203, 8
        %s205 = scalar_lea.vmem [#allocation2], %s204
        %p206 = pneg %p57
        %p207 = pneg %p54
        %s208 = sand.u32 %s72, 1
        %s209 = scalar_lea.sflag [#allocation6], %s208
        %s210 = sand.u32 %s72, 1
        %s211 = smul.addr %s210, 8
        %s212 = scalar_lea.vmem [#allocation5], %s211
        %p213 = pneg %p85
        %p214 = pneg %p82
        %p215 = pneg %p113
        %p216 = pneg %p110
        %s217 = sand.u32 %s100, 1
        %s218 = scalar_lea.sflag [#allocation4], %s217
        %s219 = sand.u32 %s100, 1
        %s220 = scalar_lea.vmem [#allocation7], %s219
        %v221 = vld [vmem:[%s187] sm:$0x3]
        %v222 = vld [vmem:[%s187 + $0x2] sm:$0x3]
        %v223 = vld [vmem:[%s187 + $0x4] sm:$0x3]
        %v224 = vld [vmem:[%s187 + $0x6] sm:$0x3]
        %v225 = vld [vmem:[%s196] sm:$0x3]
        %v226 = vld [vmem:[%s196 + $0x2] sm:$0x3]
        %v227 = vld [vmem:[%s196 + $0x4] sm:$0x3]
        %v228 = vld [vmem:[%s196 + $0x6] sm:$0x3]
        %vm229 = vcmask 1041408
        %v230 = vsel %vm229, %v221, -inf
        %v231 = vsel %vm229, %v222, -inf
        %v232 = vsel %vm229, %v223, -inf
        %v233 = vsel %vm229, %v224, -inf
        %v234 = vmax.f32 %v230, %v231
        %v235 = vmax.f32 %v232, %v233
        %v236 = vmax.f32 %v234, %v235
        %v237 = vsub.f32 %v221, %v236
        %v238 = vsub.f32 %v222, %v236
        %v239 = vsub.f32 %v223, %v236
        %v240 = vsub.f32 %v224, %v236
        %v241 = vmul.f32 %v237, 1.442695
        %v242 = vpow.pop %v241
        %v243 = vmul.f32 %v238, 1.442695
        %v244 = vpow.pop %v243
        %v245 = vmul.f32 %v239, 1.442695
        %v246 = vpow.pop %v245
        %v247 = vmul.f32 %v240, 1.442695
        %v248 = vpow.pop %v247
        %v249 = vsel %vm229, %v242, 0.0
        %v250 = vsel %vm229, %v244, 0.0
        %v251 = vadd.f32 %v249, %v250
        %v252 = vsel %vm229, %v246, 0.0
        %v253 = vadd.f32 %v251, %v252
        %v254 = vsel %vm229, %v248, 0.0
        %v255 = vadd.f32 %v253, %v254
        %v256 = vlog2.pop %v255
        %v257 = vmul.f32 %v256, 0.6931472
        %v258 = vadd.f32 %v236, %v257
        %v259 = vsel %vm229, %v225, -inf
        %v260 = vsel %vm229, %v226, -inf
        %v261 = vsel %vm229, %v227, -inf
        %v262 = vsel %vm229, %v228, -inf
        %v263 = vmax.f32 %v259, %v260
        %v264 = vmax.f32 %v261, %v262
        %v265 = vmax.f32 %v263, %v264
        %vm266 = vcmp.eq.f32.partialorder %v225, %v265
        %vm267 = vcmp.eq.f32.partialorder %v226, %v265
        %vm268 = vcmp.eq.f32.partialorder %v227, %v265
        %vm269 = vcmp.eq.f32.partialorder %v228, %v265
        %v270 = vsel %vm266, 0, 4
        %v271 = vsel %vm267, 1, 4
        %v272 = vsel %vm268, 2, 4
        %v273 = vsel %vm269, 3, 4
        %v274 = vsel %vm229, %v270, 2147483647
        %v275 = vsel %vm229, %v271, 2147483647
        %v276 = vsel %vm229, %v272, 2147483647
        %v277 = vsel %vm229, %v273, 2147483647
        %vm278 = vcmp.lt.s32.totalorder %v274, %v275
        %v279 = vsel %vm278, %v274, %v275
        %vm280 = vcmp.lt.s32.totalorder %v276, %v277
        %v281 = vsel %vm280, %v276, %v277
        %vm282 = vcmp.lt.s32.totalorder %v279, %v281
        %v283 = vsel %vm282, %v279, %v281
        %vm284 = vcmp.eq.s32.totalorder %v283, 0
        %vm285 = vcmp.eq.s32.totalorder %v283, 1
        %vm286 = vcmp.eq.s32.totalorder %v283, 2
        %vm287 = vcmp.eq.s32.totalorder %v283, 3
        %v288 = vsel %vm284, %v221, 0.0
        %v289 = vsel %vm285, %v222, 0.0
        %v290 = vsel %vm286, %v223, 0.0
        %v291 = vsel %vm287, %v224, 0.0
        %v292 = vsel %vm229, %v288, 0.0
        %v293 = vsel %vm229, %v289, 0.0
        %v294 = vadd.f32 %v292, %v293
        %v295 = vsel %vm229, %v290, 0.0
        %v296 = vadd.f32 %v294, %v295
        %v297 = vsel %vm229, %v291, 0.0
        %v298 = vadd.f32 %v296, %v297
        %v299 = vsub.f32 %v258, %v298
        %v300 = vsel %vm229, %v299, 0.0
        %v301 = vrot.slane %v300, 4
        %v302 = vadd.f32 %v300, %v301
        %v303 = vrot.slane %v302, 2
        %v304 = vadd.f32 %v302, %v303
        %v305 = vrot.slane %v304, 1
        %v306 = vadd.f32 %v304, %v305
        %307 = vst [vmem:[%s220] sm:$0x1] %v306
        %s308 = sand.u32 %s100, 1
        %s309 = scalar_lea.sflag [#allocation4], %s308
        %s310 = sand.u32 %s100, 1
        %s311 = scalar_lea.vmem [#allocation7], %s310
        // Predicated region
        $region37: #{tpu_custom_call.1} parent=27 // pred_check
          %p312 = pneg %p110
        $region38: #{tpu_custom_call.1} parent=27 // pred_check_branch
          %314 = sbr.rel (%p312) target = $region40
        $region39: #{tpu_custom_call.1} parent=27 // pred_region
          %s316 = ssub.s32 16, 16
          %317 = vsyncadd %s309, %s316
          %s318 = sadd.s32 %s27, %s26
          %s319 = smul.addr %s318, 16
          %s320 = scalar_lea.hbm %s2, %s319
          %s322 = sshll.u32 %s311, 4
          %s323 = int_to_ptr.vmem [resolvable:$true] %s322
          %325 = dma.vmem_to_hbm [thread:$0]  %s323, 16, %s320, %s309
        $region40: #{tpu_custom_call.1} parent=27 // pred_fallthru
          _
      $region28: #{tpu_custom_call.1} parent=5 // pred_fallthru
        _
      %p326 = scmp.le.s32.totalorder 2, %s17
      // Predicated region
      $region41: #{tpu_custom_call.1} parent=5 // pred_check
        %p327 = pneg %p326
      $region42: #{tpu_custom_call.1} parent=5 // pred_check_branch
        %329 = sbr.rel (%p327) target = $region44
      $region43: #{tpu_custom_call.1} parent=5 // pred_region
        %s330 = ssub.s32 %s17, 2
        // Predicated region
        $region45: #{tpu_custom_call.1} parent=43 // pred_check
          %p331 = pneg %p116
        $region46: #{tpu_custom_call.1} parent=43 // pred_check_branch
          %333 = sbr.rel (%p331) target = $region48
        $region47: #{tpu_custom_call.1} parent=43 // pred_region
          %s334 = sand.u32 %s101, 1
          %s335 = scalar_lea.sflag [#allocation4], %s334
          %s336 = sand.u32 %s101, 1
          %s337 = scalar_lea.vmem [#allocation7], %s336
          %338 = dma.done %s335, 16
        $region48: #{tpu_custom_call.1} parent=43 // pred_fallthru
          _
      $region44: #{tpu_custom_call.1} parent=5 // pred_fallthru
        _
    $region6: #{tpu_custom_call.1} parent=1 // loop_footer
      %s21 = sadd.s32 1, %s17
    $region7: #{tpu_custom_call.1} parent=1 // loop_footer_branch
      %16 = sbr.rel target = $region3
    $region8: #{tpu_custom_call.1} parent=1 // loop_exit
      _
    %339 = vsyncpa [#allocation3], 1
    %s340 = scalar_lea.sflag [#allocation3], 1
    %341 = vsyncpa %s340, 1
    %342 = vsyncpa [#allocation6], 1
    %s343 = scalar_lea.sflag [#allocation6], 1
    %344 = vsyncpa %s343, 1
    %345 = vsyncpa [#allocation4], 1
    %s346 = scalar_lea.sflag [#allocation4], 1
    %347 = vsyncpa %s346, 1

</llo_original>
